<compile_context>
chip_gen: v6e
topology: v6e:2x2x1
jax: 0.10.0
libtpu: 0.0.40
codegen_flags: <defaults>
</compile_context>

<pallas_src>
import functools

import jax
import jax.numpy as jnp
from jax.experimental import pallas as pl
from jax.experimental.pallas import tpu as pltpu

_MiB = 1024 * 1024


def _round_up(x, m):
    return ((x + m - 1) // m) * m


def _padded_2d_bytes(shape, itemsize):
    r, c = shape
    return _round_up(max(r, 1), 8) * _round_up(max(c, 1), 128) * itemsize


def _tpu_vmem_capacity_bytes():
    try:
        info = pltpu.get_tpu_info()
        cap = getattr(info, "vmem_capacity_bytes", None)
        if cap:
            return int(cap)
    except Exception:
        pass
    return 64 * _MiB  # conservative (v7x-sized) default


def _mlp_kernel(num_hidden_layer, mm_dtype, *refs):
    """Fused MLP forward on one batch tile.

    refs (all VMEM):
      x_ref                       # [TB, F]  batch-major tile straight from HBM
      w_in, b_in                  # [H, F], [H, 1]
      (w_h{i}, b_h{i}) * K        # [H, H], [H, 1]
      w_out_col, b_out            # [H, 1], [1, 1]
      o_ref                       # [1, TB]  lane-dense output tile
    """
    x_ref = refs[0]
    param_refs = refs[1:-1]
    o_ref = refs[-1]

    def bias_relu(acc, b_ref):
        # bias [out, 1] broadcasts across lanes; stays f32.
        return jnp.maximum(acc + b_ref[...].astype(jnp.float32), 0.0)

    # input_linear + input_relu.  Contract W[h,f] against X[b,f] on f directly: the
    # feature-major transpose is handled inside the kernel (MXU operand path / XLU)
    # instead of as a separate HBM-round-trip XLA op in the wrapper.
    acc = jax.lax.dot_general(
        param_refs[0][...], x_ref[...],
        dimension_numbers=(((1,), (1,)), ((), ())),
        preferred_element_type=jnp.float32,
    )  # [H, TB], f32
    acc = bias_relu(acc, param_refs[1])

    # hidden_linear{i} + hidden_relu{i}
    for i in range(num_hidden_layer):
        w_ref, b_ref = param_refs[2 + 2 * i], param_refs[3 + 2 * i]
        acc = jnp.dot(w_ref[...], acc.astype(mm_dtype),
                      preferred_element_type=jnp.float32)
        acc = bias_relu(acc, b_ref)

    # output_linear ([1,H] @ [H,TB]) as VPU broadcast-mul + XLU sublane reduce:
    # an MXU pass here would produce one useful row out of 128/256 columns.
    w_out = param_refs[-2][...].astype(jnp.float32)   # [H, 1]
    b_out = param_refs[-1][...].astype(jnp.float32)   # [1, 1]
    out = jnp.sum(w_out * acc, axis=0, keepdims=True) + b_out   # [1, TB]
    o_ref[...] = out.astype(o_ref.dtype)


def struct2param_forward(x, params, *, num_hidden_layer, tile_b=None, use_bf16=False):
    """x: [B, num_features] float32.
    params: flat list [w_in, b_in, (w_h, b_h)*K, w_out, b_out], PyTorch Linear layout
            (weights [out, in], biases [out, 1]).
    Returns [B], matching `self.ff_layers(features).squeeze()`.
    """
    B, F = x.shape
    H = params[0].shape[0]

    mm_dtype = jnp.bfloat16 if use_bf16 else jnp.float32

    # ---- one-time param repack (constants, outside the kernel) -------------------
    # Weights cast to the matmul dtype once (not per grid step); the final weight
    # [1, H] is stored as a column [H, 1] so the last layer runs on VPU+XLU.
    kern_params = []
    for li in range(1 + num_hidden_layer):
        w, b = params[2 * li], params[2 * li + 1]
        kern_params.append(w.astype(mm_dtype))
        kern_params.append(b.astype(jnp.float32))
    kern_params.append(params[-2].reshape(H, 1).astype(jnp.float32))
    kern_params.append(params[-1].reshape(1, 1).astype(jnp.float32))

    x_in = x.astype(mm_dtype) if use_bf16 else x

    # ---- generation-aware VMEM budget ---------------------------------------------
    vmem_cap = _tpu_vmem_capacity_bytes()              # 128 MiB v5e/v6e, 64 MiB v7x
    vmem_limit = max(32 * _MiB, min(vmem_cap - 16 * _MiB, 112 * _MiB))
    dual_core = vmem_cap <= 64 * _MiB                  # v7x-like: 2 TCs per chip

    param_bytes = sum(_padded_2d_bytes(p.shape, p.dtype.itemsize)
                      for p in kern_params)            # single-buffered params
    mm_bytes = jnp.dtype(mm_dtype).itemsize

    # ---- batch tile selection: lane-aligned, big enough to amortize per-step cost --
    if tile_b is None:
        budget = vmem_limit - param_bytes - 4 * _MiB   # headroom for compiler scratch
        tile_b = 128
        for cand in (32768, 16384, 8192, 4096, 2048, 1024, 512, 256, 128):
            x_tile = 2 * cand * _round_up(F, 128) * mm_bytes        # dbl-buffered x
            out_tile = 2 * 8 * cand * 4                             # dbl-buffered out
            live = cand * (_round_up(F, 8) * mm_bytes + 2 * _round_up(H, 8) * 4)
            if x_tile + out_tile + live <= budget:
                tile_b = cand
                break
        tile_b = min(tile_b, _round_up(B, 128))
        if dual_core:
            # Prefer an even number of grid steps so the "parallel" axis splits
            # evenly across the two v7x TensorCores (no straggler core).
            steps = -(-B // tile_b)
            if steps == 1 and B >= 256:
                tile_b = _round_up(-(-B // 2), 128)
            elif steps > 1 and steps % 2 == 1:
                tile_b = max(128, _round_up(-(-B // (steps + 1)), 128))
    assert tile_b % 128 == 0, "tile_b must be a multiple of 128 (lane width)"

    # Pad the batch only when it is not tile-aligned (no wrapper transpose anymore).
    Bp = _round_up(B, tile_b)
    if Bp != B:
        x_in = jnp.pad(x_in, ((0, Bp - B), (0, 0)))

    const_spec = lambda shape: pl.BlockSpec(
        shape, lambda i: (0, 0), pipeline_mode=pl.Buffered(1))
    # TODO(synk): if profiling shows exposed DMA on the x stream at large tile_b,
    # bump this spec to pipeline_mode=pl.Buffered(3) (and budget one extra x tile).
    in_specs = [pl.BlockSpec((tile_b, F), lambda i: (i, 0))]
    in_specs += [const_spec(p.shape) for p in kern_params]
    out_spec = pl.BlockSpec((1, tile_b), lambda i: (0, i))   # lane-dense output

    kernel = functools.partial(_mlp_kernel, num_hidden_layer, mm_dtype)

    out = pl.pallas_call(
        kernel,
        out_shape=jax.ShapeDtypeStruct((1, Bp), x.dtype),
        grid_spec=pltpu.PrefetchScalarGridSpec(
            num_scalar_prefetch=0,
            grid=(Bp // tile_b,),
            in_specs=in_specs,
            out_specs=out_spec,
        ),
        compiler_params=pltpu.CompilerParams(
            dimension_semantics=("parallel",),
            vmem_limit_bytes=vmem_limit,
        ),
    )(x_in, *kern_params)

    # TODO(synk): torch .squeeze() returns a 0-d scalar when B == 1; we return [B].
    return out.reshape(Bp)[:B]


def init_struct2param_params(key, num_features, num_hidden_layer, hidden_layer_width):
    """Deterministic init mimicking torch.nn.Linear (uniform +/- 1/sqrt(fan_in)).
    Weights stored as [out, in] (PyTorch layout); biases as [out, 1]."""
    dims = [(num_features, hidden_layer_width)]
    dims += [(hidden_layer_width, hidden_layer_width)] * num_hidden_layer
    dims += [(hidden_layer_width, 1)]

    params = []
    for fan_in, fan_out in dims:
        key, kw, kb = jax.random.split(key, 3)
        bound = 1.0 / jnp.sqrt(jnp.float32(fan_in))
        w = jax.random.uniform(kw, (fan_out, fan_in), jnp.float32, -bound, bound)
        b = jax.random.uniform(kb, (fan_out, 1), jnp.float32, -bound, bound)
        params += [w, b]
    return params


def reference_forward(x, params, num_hidden_layer):
    """Pure-JAX reference of the same forward pass (batch-major math)."""
    h = x
    w, b = params[0], params[1]
    h = jnp.maximum(h @ w.T + b.T, 0.0)
    for i in range(num_hidden_layer):
        w, b = params[2 + 2 * i], params[3 + 2 * i]
        h = jnp.maximum(h @ w.T + b.T, 0.0)
    w, b = params[-2], params[-1]
    out = h @ w.T + b.T
    return out.reshape(-1)


if __name__ == "__main__":
    # Small, deterministic example shapes.
    batch = 8
    num_features = 16
    num_hidden_layer = 1
    hidden_layer_width = 32

    key = jax.random.PRNGKey(0)
    key, kx = jax.random.split(key)
    x = jax.random.normal(kx, (batch, num_features), jnp.float32)

    params = init_struct2param_params(
        key, num_features, num_hidden_layer, hidden_layer_width
    )

    out = struct2param_forward(x, params, num_hidden_layer=num_hidden_layer)
    out = jax.block_until_ready(out)

    ref = reference_forward(x, params, num_hidden_layer)
    assert out.shape == (batch,)
    assert jnp.allclose(out, ref, atol=1e-5, rtol=1e-5)

    print("KERNEL_OK")
</pallas_src>

<mosaic_0001>
module attributes {stable_mosaic.version = 11 : i64} {
  func.func @_mlp_kernel(%arg0: i32, %arg1: memref<128x16xf32, #tpu.memory_space<vmem>>, %arg2: memref<32x16xf32, #tpu.memory_space<vmem>>, %arg3: memref<32x1xf32, #tpu.memory_space<vmem>>, %arg4: memref<32x32xf32, #tpu.memory_space<vmem>>, %arg5: memref<32x1xf32, #tpu.memory_space<vmem>>, %arg6: memref<32x1xf32, #tpu.memory_space<vmem>>, %arg7: memref<1x1xf32, #tpu.memory_space<vmem>>, %arg8: memref<1x128xf32, #tpu.memory_space<vmem>>) attributes {dimension_semantics = [#tpu.dimension_semantics<parallel>], iteration_bounds = array<i64: 1>, scalar_prefetch = 0 : i64, scratch_operands = 0 : i64, tpu.core_type = #tpu.core_type<tc>, window_params = [{transform_indices = @transform_0, window_bounds = array<i64: 128, 16>}, {pipeline_mode = #tpu.pipeline_mode<synchronous>, transform_indices = @transform_1, window_bounds = array<i64: 32, 16>}, {pipeline_mode = #tpu.pipeline_mode<synchronous>, transform_indices = @transform_2, window_bounds = array<i64: 32, 1>}, {pipeline_mode = #tpu.pipeline_mode<synchronous>, transform_indices = @transform_3, window_bounds = array<i64: 32, 32>}, {pipeline_mode = #tpu.pipeline_mode<synchronous>, transform_indices = @transform_4, window_bounds = array<i64: 32, 1>}, {pipeline_mode = #tpu.pipeline_mode<synchronous>, transform_indices = @transform_5, window_bounds = array<i64: 32, 1>}, {pipeline_mode = #tpu.pipeline_mode<synchronous>, transform_indices = @transform_6, window_bounds = array<i64: 1, 1>}, {transform_indices = @transform_7, window_bounds = array<i64: 1, 128>}]} {
    %c0 = arith.constant 0 : index
    %c0_0 = arith.constant 0 : index
    %0 = vector.load %arg2[%c0, %c0_0] : memref<32x16xf32, #tpu.memory_space<vmem>>, vector<32x16xf32>
    %c0_1 = arith.constant 0 : index
    %c0_2 = arith.constant 0 : index
    %1 = vector.load %arg1[%c0_1, %c0_2] : memref<128x16xf32, #tpu.memory_space<vmem>>, vector<128x16xf32>
    %cst = arith.constant dense<0.000000e+00> : vector<32x128xf32>
    %2 = tpu.matmul %0, %1, %cst {dimension_numbers = #tpu.dot_dimension_numbers<[1], [1], [0], [0], [0, 0, 1, 0], [], []>} : vector<32x16xf32>, vector<128x16xf32>, vector<32x128xf32> -> vector<32x128xf32>
    %c0_3 = arith.constant 0 : index
    %c0_4 = arith.constant 0 : index
    %3 = vector.load %arg3[%c0_3, %c0_4] : memref<32x1xf32, #tpu.memory_space<vmem>>, vector<32x1xf32>
    %4 = vector.broadcast %3 : vector<32x1xf32> to vector<32x128xf32>
    %5 = arith.addf %2, %4 : vector<32x128xf32>
    %cst_5 = arith.constant 0.000000e+00 : f32
    %6 = vector.broadcast %cst_5 : f32 to vector<32x128xf32>
    %7 = arith.maximumf %5, %6 : vector<32x128xf32>
    %c0_6 = arith.constant 0 : index
    %c0_7 = arith.constant 0 : index
    %8 = vector.load %arg4[%c0_6, %c0_7] : memref<32x32xf32, #tpu.memory_space<vmem>>, vector<32x32xf32>
    %cst_8 = arith.constant dense<0.000000e+00> : vector<32x128xf32>
    %9 = tpu.matmul %8, %7, %cst_8 {dimension_numbers = #tpu.dot_dimension_numbers<[1], [0], [0], [1], [0, 0, 1, 1], [], []>} : vector<32x32xf32>, vector<32x128xf32>, vector<32x128xf32> -> vector<32x128xf32>
    %c0_9 = arith.constant 0 : index
    %c0_10 = arith.constant 0 : index
    %10 = vector.load %arg5[%c0_9, %c0_10] : memref<32x1xf32, #tpu.memory_space<vmem>>, vector<32x1xf32>
    %11 = vector.broadcast %10 : vector<32x1xf32> to vector<32x128xf32>
    %12 = arith.addf %9, %11 : vector<32x128xf32>
    %cst_11 = arith.constant 0.000000e+00 : f32
    %13 = vector.broadcast %cst_11 : f32 to vector<32x128xf32>
    %14 = arith.maximumf %12, %13 : vector<32x128xf32>
    %c0_12 = arith.constant 0 : index
    %c0_13 = arith.constant 0 : index
    %15 = vector.load %arg6[%c0_12, %c0_13] : memref<32x1xf32, #tpu.memory_space<vmem>>, vector<32x1xf32>
    %c0_14 = arith.constant 0 : index
    %c0_15 = arith.constant 0 : index
    %16 = vector.load %arg7[%c0_14, %c0_15] : memref<1x1xf32, #tpu.memory_space<vmem>>, vector<1x1xf32>
    %17 = vector.broadcast %15 : vector<32x1xf32> to vector<32x128xf32>
    %18 = arith.mulf %17, %14 : vector<32x128xf32>
    %cst_16 = arith.constant dense<0.000000e+00> : vector<128xf32>
    %19 = vector.multi_reduction <add>, %18, %cst_16 [0] : vector<32x128xf32> to vector<128xf32>
    %20 = vector.shape_cast %19 : vector<128xf32> to vector<1x128xf32>
    %21 = vector.broadcast %16 : vector<1x1xf32> to vector<1x128xf32>
    %22 = arith.addf %20, %21 : vector<1x128xf32>
    %c0_17 = arith.constant 0 : index
    %c0_18 = arith.constant 0 : index
    %23 = vector.load %arg8[%c0_17, %c0_18] : memref<1x128xf32, #tpu.memory_space<vmem>>, vector<1x128xf32>
    tpu.vector_store %arg8[%c0_17, %c0_18], %22 {strides = array<i32>} : memref<1x128xf32, #tpu.memory_space<vmem>>, vector<1x128xf32>,
    return
  }
  func.func @transform_0(%arg0: i32) -> (i32, i32) {
    %c0_i32 = arith.constant 0 : i32
    %c0_i32_0 = arith.constant 0 : i32
    return %arg0, %c0_i32 : i32, i32
  }
  func.func @transform_1(%arg0: i32) -> (i32, i32) {
    %c0_i32 = arith.constant 0 : i32
    %c0_i32_0 = arith.constant 0 : i32
    %c0_i32_1 = arith.constant 0 : i32
    return %c0_i32, %c0_i32_0 : i32, i32
  }
  func.func @transform_2(%arg0: i32) -> (i32, i32) {
    %c0_i32 = arith.constant 0 : i32
    %c0_i32_0 = arith.constant 0 : i32
    %c0_i32_1 = arith.constant 0 : i32
    return %c0_i32, %c0_i32_0 : i32, i32
  }
  func.func @transform_3(%arg0: i32) -> (i32, i32) {
    %c0_i32 = arith.constant 0 : i32
    %c0_i32_0 = arith.constant 0 : i32
    %c0_i32_1 = arith.constant 0 : i32
    return %c0_i32, %c0_i32_0 : i32, i32
  }
  func.func @transform_4(%arg0: i32) -> (i32, i32) {
    %c0_i32 = arith.constant 0 : i32
    %c0_i32_0 = arith.constant 0 : i32
    %c0_i32_1 = arith.constant 0 : i32
    return %c0_i32, %c0_i32_0 : i32, i32
  }
  func.func @transform_5(%arg0: i32) -> (i32, i32) {
    %c0_i32 = arith.constant 0 : i32
    %c0_i32_0 = arith.constant 0 : i32
    %c0_i32_1 = arith.constant 0 : i32
    return %c0_i32, %c0_i32_0 : i32, i32
  }
  func.func @transform_6(%arg0: i32) -> (i32, i32) {
    %c0_i32 = arith.constant 0 : i32
    %c0_i32_0 = arith.constant 0 : i32
    %c0_i32_1 = arith.constant 0 : i32
    return %c0_i32, %c0_i32_0 : i32, i32
  }
  func.func @transform_7(%arg0: i32) -> (i32, i32) {
    %c0_i32 = arith.constant 0 : i32
    %c0_i32_0 = arith.constant 0 : i32
    return %c0_i32, %arg0 : i32, i32
  }
}

</mosaic_0001>

<llo_original>
// kernel: tpu_custom_call.1
$region0: #{tpu_custom_call.1}
  #allocation0 [shape = 'u32[]', space=smem, size = 0x4, offset = 0x4, fixed_abs, tag = 'smem constant byte address 0x4 - core index']
  #allocation1 [shape = 'u32[144,128]{1,0:T(1,128)}', space=vmem, size = 0x12000, scoped, tag = 'internal scratch']
  #allocation2 [shape = 'f32[1,1]{1,0:T(1,128)S(1)}', space=vmem, size = 0x200, scoped, tag = 'scoped memory for tpu_custom_call.1']
  %s0 = inlined_call_operand.vmem [shape: f32[128,16], index: 0, kind: input, shape index: {}]
  %s1 = inlined_call_operand.vmem [shape: f32[32,16], index: 1, kind: input, shape index: {}]
  %s2 = inlined_call_operand.vmem [shape: f32[32,1], index: 2, kind: input, shape index: {}]
  %s3 = inlined_call_operand.vmem [shape: f32[32,32], index: 3, kind: input, shape index: {}]
  %s4 = inlined_call_operand.vmem [shape: f32[32,1], index: 4, kind: input, shape index: {}]
  %s5 = inlined_call_operand.vmem [shape: f32[32,1], index: 5, kind: input, shape index: {}]
  %s6 = inlined_call_operand.<no memory space> [shape: f32[1,1], index: 6, kind: input, shape index: {}]
  %s7 = inlined_call_operand.hbm [shape: f32[1,128], index: 7, kind: output, shape index: {}]
  %s8 = sld [smem:[#allocation0]]
  $region38: #{tpu_custom_call.1} parent=0
    _
  %s10 = ssub.s32 1, %s8
  %s11 = scalar_select 0, %s10, %s8
  %v12 = vstv %s6
  %13 = vst [vmem:[#allocation2] sm:$0x1] %v12
  $region1: #{tpu_custom_call.1} parent=0
    #allocation3 [shape = 'u8[512]{0}', space=vmem, size = 0x400, scoped, tag = 'output window, operand 0, single buffered']
    #allocation4 [shape = 's32[1]{0}', space=sflag, size = 0x4, scoped, tag = 'scoped memory for tpu_custom_call.1']
    %14 = vsyncpa [#allocation4], 0
    // Predicated region
    $region2: #{tpu_custom_call.1} parent=1 // pred_check
      _
    $region3: #{tpu_custom_call.1} parent=1 // pred_check_branch
      %16 = sbr.rel (0) target = $region5
    $region4: #{tpu_custom_call.1} parent=1 // pred_region
      _
    $region5: #{tpu_custom_call.1} parent=1 // pred_fallthru
      _
    // Predicated region
    $region6: #{tpu_custom_call.1} parent=1 // pred_check
      _
    $region7: #{tpu_custom_call.1} parent=1 // pred_check_branch
      %18 = sbr.rel (0) target = $region9
    $region8: #{tpu_custom_call.1} parent=1 // pred_region
      _
    $region9: #{tpu_custom_call.1} parent=1 // pred_fallthru
      _
    // Predicated region
    $region10: #{tpu_custom_call.1} parent=1 // pred_check
      _
    $region11: #{tpu_custom_call.1} parent=1 // pred_check_branch
      %20 = sbr.rel (0) target = $region13
    $region12: #{tpu_custom_call.1} parent=1 // pred_region
      _
    $region13: #{tpu_custom_call.1} parent=1 // pred_fallthru
      _
    // Predicated region
    $region14: #{tpu_custom_call.1} parent=1 // pred_check
      _
    $region15: #{tpu_custom_call.1} parent=1 // pred_check_branch
      %22 = sbr.rel (0) target = $region17
    $region16: #{tpu_custom_call.1} parent=1 // pred_region
      _
    $region17: #{tpu_custom_call.1} parent=1 // pred_fallthru
      _
    // Predicated region
    $region18: #{tpu_custom_call.1} parent=1 // pred_check
      _
    $region19: #{tpu_custom_call.1} parent=1 // pred_check_branch
      %24 = sbr.rel (0) target = $region21
    $region20: #{tpu_custom_call.1} parent=1 // pred_region
      _
    $region21: #{tpu_custom_call.1} parent=1 // pred_fallthru
      _
    // Predicated region
    $region22: #{tpu_custom_call.1} parent=1 // pred_check
      _
    $region23: #{tpu_custom_call.1} parent=1 // pred_check_branch
      %26 = sbr.rel (0) target = $region25
    $region24: #{tpu_custom_call.1} parent=1 // pred_region
      _
    $region25: #{tpu_custom_call.1} parent=1 // pred_fallthru
      _
    // Predicated region
    $region26: #{tpu_custom_call.1} parent=1 // pred_check
      _
    $region27: #{tpu_custom_call.1} parent=1 // pred_check_branch
      %28 = sbr.rel (0) target = $region29
    $region28: #{tpu_custom_call.1} parent=1 // pred_region
      _
    $region29: #{tpu_custom_call.1} parent=1 // pred_fallthru
      _
    %v29 = vld [vmem:[%s1] sm:$0xff]
    %v30 = vld [vmem:[%s1 + $0x8] sm:$0xff]
    %v31 = vld [vmem:[%s1 + $0x10] sm:$0xff]
    %v32 = vld [vmem:[%s1 + $0x18] sm:$0xff]
    %v33 = vld [vmem:[%s0] sm:$0xff]
    %v34 = vld [vmem:[%s0 + $0x8] sm:$0xff]
    %v35 = vld [vmem:[%s0 + $0x10] sm:$0xff]
    %v36 = vld [vmem:[%s0 + $0x18] sm:$0xff]
    %v37 = vld [vmem:[%s0 + $0x20] sm:$0xff]
    %v38 = vld [vmem:[%s0 + $0x28] sm:$0xff]
    %v39 = vld [vmem:[%s0 + $0x30] sm:$0xff]
    %v40 = vld [vmem:[%s0 + $0x38] sm:$0xff]
    %v41 = vld [vmem:[%s0 + $0x40] sm:$0xff]
    %v42 = vld [vmem:[%s0 + $0x48] sm:$0xff]
    %v43 = vld [vmem:[%s0 + $0x50] sm:$0xff]
    %v44 = vld [vmem:[%s0 + $0x58] sm:$0xff]
    %v45 = vld [vmem:[%s0 + $0x60] sm:$0xff]
    %v46 = vld [vmem:[%s0 + $0x68] sm:$0xff]
    %v47 = vld [vmem:[%s0 + $0x70] sm:$0xff]
    %v48 = vld [vmem:[%s0 + $0x78] sm:$0xff]
    %v49 = vld [vmem:[%s2] sm:$0xff]
    %v50 = vld [vmem:[%s2 + $0x8] sm:$0xff]
    %v51 = vld [vmem:[%s2 + $0x10] sm:$0xff]
    %v52 = vld [vmem:[%s2 + $0x18] sm:$0xff]
    %54 = vset.pattern.permute.xlu0 0
    %55 = vperm.xlu0 %54, %v49
    %v56 = vpop.permute.xlu0 %55
    %59 = vset.pattern.permute.xlu0 0
    %60 = vperm.xlu0 %59, %v50
    %v61 = vpop.permute.xlu0 %60
    %64 = vset.pattern.permute.xlu0 0
    %65 = vperm.xlu0 %64, %v51
    %v66 = vpop.permute.xlu0 %65
    %69 = vset.pattern.permute.xlu0 0
    %70 = vperm.xlu0 %69, %v52
    %v71 = vpop.permute.xlu0 %70
    %vm73 = vcmask 130048
    %v75 = vsel %vm73, %v29, 0
    %v78 = vsel %vm73, %v30, 0
    %v81 = vsel %vm73, %v31, 0
    %v84 = vsel %vm73, %v32, 0
    %v87 = vsel %vm73, %v33, 0
    %v90 = vsel %vm73, %v34, 0
    %v93 = vsel %vm73, %v35, 0
    %v96 = vsel %vm73, %v36, 0
    %v99 = vsel %vm73, %v37, 0
    %v102 = vsel %vm73, %v38, 0
    %v105 = vsel %vm73, %v39, 0
    %v108 = vsel %vm73, %v40, 0
    %v111 = vsel %vm73, %v41, 0
    %v114 = vsel %vm73, %v42, 0
    %v117 = vsel %vm73, %v43, 0
    %v120 = vsel %vm73, %v44, 0
    %v123 = vsel %vm73, %v45, 0
    %v126 = vsel %vm73, %v46, 0
    %v129 = vsel %vm73, %v47, 0
    %v132 = vsel %vm73, %v48, 0
    %134 = vmatprep.subr.mxu0 0.0
    %135 = vmatpush1.xpose.msra.mxu0 %v132
    %136 = vmatprep.subr.mxu0 0.0
    %137 = vmatpush1.xpose.msra.mxu0 %v129
    %138 = vmatprep.subr.mxu0 0.0
    %139 = vmatpush1.xpose.msra.mxu0 %v126
    %140 = vmatprep.subr.mxu0 0.0
    %141 = vmatpush1.xpose.msra.mxu0 %v123
    %142 = vmatprep.subr.mxu0 0.0
    %143 = vmatpush1.xpose.msra.mxu0 %v120
    %144 = vmatprep.subr.mxu0 0.0
    %145 = vmatpush1.xpose.msra.mxu0 %v117
    %146 = vmatprep.subr.mxu0 0.0
    %147 = vmatpush1.xpose.msra.mxu0 %v114
    %148 = vmatprep.subr.mxu0 0.0
    %149 = vmatpush1.xpose.msra.mxu0 %v111
    %150 = vmatprep.subr.mxu0 0.0
    %151 = vmatpush1.xpose.msra.mxu0 %v108
    %152 = vmatprep.subr.mxu0 0.0
    %153 = vmatpush1.xpose.msra.mxu0 %v105
    %154 = vmatprep.subr.mxu0 0.0
    %155 = vmatpush1.xpose.msra.mxu0 %v102
    %156 = vmatprep.subr.mxu0 0.0
    %157 = vmatpush1.xpose.msra.mxu0 %v99
    %158 = vmatprep.subr.mxu0 0.0
    %159 = vmatpush1.xpose.msra.mxu0 %v96
    %160 = vmatprep.subr.mxu0 0.0
    %161 = vmatpush1.xpose.msra.mxu0 %v93
    %162 = vmatprep.subr.mxu0 0.0
    %163 = vmatpush1.xpose.msra.mxu0 %v90
    %164 = vmatprep.subr.mxu0 0.0
    %165 = vmatpush1.xpose.msra.mxu0 %v87
    %166 = vmatprep.subr.mxu0 0.0
    %167 = vmatpush2.xpose.msra.mxu0 0.0
    %168 = vmatprep.subr.mxu0 0.0
    %169 = vmatpush2.xpose.msra.mxu0 0.0
    %170 = vmatprep.subr.mxu0 0.0
    %171 = vmatpush2.xpose.msra.mxu0 0.0
    %172 = vmatprep.subr.mxu0 0.0
    %173 = vmatpush2.xpose.msra.mxu0 0.0
    %174 = vmatprep.subr.mxu0 0.0
    %175 = vmatpush2.xpose.msra.mxu0 0.0
    %176 = vmatprep.subr.mxu0 0.0
    %177 = vmatpush2.xpose.msra.mxu0 0.0
    %178 = vmatprep.subr.mxu0 0.0
    %179 = vmatpush2.xpose.msra.mxu0 0.0
    %180 = vmatprep.subr.mxu0 0.0
    %181 = vmatpush2.xpose.msra.mxu0 0.0
    %182 = vmatprep.subr.mxu0 0.0
    %183 = vmatpush2.xpose.msra.mxu0 0.0
    %184 = vmatprep.subr.mxu0 0.0
    %185 = vmatpush2.xpose.msra.mxu0 0.0
    %186 = vmatprep.subr.mxu0 0.0
    %187 = vmatpush2.xpose.msra.mxu0 0.0
    %188 = vmatprep.subr.mxu0 0.0
    %189 = vmatpush2.xpose.msra.mxu0 0.0
    %190 = vmatprep.subr.mxu0 0.0
    %191 = vmatpush2.xpose.msra.mxu0 0.0
    %192 = vmatprep.subr.mxu0 0.0
    %193 = vmatpush2.xpose.msra.mxu0 0.0
    %194 = vmatprep.subr.mxu0 0.0
    %195 = vmatpush2.xpose.msra.mxu0 0.0
    %196 = vmatprep.subr.mxu0 0.0
    %197 = vmatpush2.xpose.msra.mxu0 0.0
    %198 = vmatprep.mubr.f32.mxu0 0.0
    %199 = vmatmul.mubr.f32.gmra.mxu0 %v75
    %v200 = vpop.f32.mrf.mxu0
    %v201 = vadd.f32 %v56, %v200
    %v202 = vpop.f32.mrf.mxu0
    %203 = vmatprep.mubr.f32.mxu0 0.0
    %204 = vmatmul.mubr.f32.gmra.mxu0 %v78
    %v205 = vpop.f32.mrf.mxu0
    %v206 = vadd.f32 %v61, %v205
    %v207 = vpop.f32.mrf.mxu0
    %208 = vmatprep.mubr.f32.mxu0 0.0
    %209 = vmatmul.mubr.f32.gmra.mxu0 %v81
    %v210 = vpop.f32.mrf.mxu0
    %v211 = vadd.f32 %v66, %v210
    %v212 = vpop.f32.mrf.mxu0
    %213 = vmatprep.mubr.f32.mxu0 0.0
    %214 = vmatmul.mubr.f32.gmra.mxu0 %v84
    %v215 = vpop.f32.mrf.mxu0
    %v216 = vadd.f32 %v71, %v215
    %v217 = vpop.f32.mrf.mxu0
    %218 = vdwg.mxu0
    %v219 = vmax.f32 %v201, 0.0
    %v220 = vmax.f32 %v206, 0.0
    %v221 = vmax.f32 %v211, 0.0
    %v222 = vmax.f32 %v216, 0.0
    %v223 = vld [vmem:[%s3] sm:$0xff]
    %v224 = vld [vmem:[%s3 + $0x8] sm:$0xff]
    %v225 = vld [vmem:[%s3 + $0x10] sm:$0xff]
    %v226 = vld [vmem:[%s3 + $0x18] sm:$0xff]
    %v227 = vld [vmem:[%s4] sm:$0xff]
    %v228 = vld [vmem:[%s4 + $0x8] sm:$0xff]
    %v229 = vld [vmem:[%s4 + $0x10] sm:$0xff]
    %v230 = vld [vmem:[%s4 + $0x18] sm:$0xff]
    %232 = vset.pattern.permute.xlu0 0
    %233 = vperm.xlu0 %232, %v227
    %v234 = vpop.permute.xlu0 %233
    %237 = vset.pattern.permute.xlu0 0
    %238 = vperm.xlu0 %237, %v228
    %v239 = vpop.permute.xlu0 %238
    %242 = vset.pattern.permute.xlu0 0
    %243 = vperm.xlu0 %242, %v229
    %v244 = vpop.permute.xlu0 %243
    %247 = vset.pattern.permute.xlu0 0
    %248 = vperm.xlu0 %247, %v230
    %v249 = vpop.permute.xlu0 %248
    %vm251 = vcmask 261120
    %v253 = vsel %vm251, %v223, 0
    %v256 = vsel %vm251, %v224, 0
    %v259 = vsel %vm251, %v225, 0
    %v262 = vsel %vm251, %v226, 0
    %264 = vmatprep.subr.mxu0 0.0
    %265 = vmatpush1.msra.mxu0 0.0
    %266 = vmatprep.subr.mxu0 0.0
    %267 = vmatpush1.msra.mxu0 0.0
    %268 = vmatprep.subr.mxu0 0.0
    %269 = vmatpush1.msra.mxu0 0.0
    %270 = vmatprep.subr.mxu0 0.0
    %271 = vmatpush1.msra.mxu0 0.0
    %272 = vmatprep.subr.mxu0 0.0
    %273 = vmatpush1.msra.mxu0 0.0
    %274 = vmatprep.subr.mxu0 0.0
    %275 = vmatpush1.msra.mxu0 0.0
    %276 = vmatprep.subr.mxu0 0.0
    %277 = vmatpush1.msra.mxu0 0.0
    %278 = vmatprep.subr.mxu0 0.0
    %279 = vmatpush1.msra.mxu0 0.0
    %280 = vmatprep.subr.mxu0 0.0
    %281 = vmatpush1.msra.mxu0 0.0
    %282 = vmatprep.subr.mxu0 0.0
    %283 = vmatpush1.msra.mxu0 0.0
    %284 = vmatprep.subr.mxu0 0.0
    %285 = vmatpush1.msra.mxu0 0.0
    %286 = vmatprep.subr.mxu0 0.0
    %287 = vmatpush1.msra.mxu0 0.0
    %288 = vmatprep.subr.mxu0 0.0
    %289 = vmatpush1.msra.mxu0 %v222
    %290 = vmatprep.subr.mxu0 0.0
    %291 = vmatpush1.msra.mxu0 %v221
    %292 = vmatprep.subr.mxu0 0.0
    %293 = vmatpush1.msra.mxu0 %v220
    %294 = vmatprep.subr.mxu0 0.0
    %295 = vmatpush1.msra.mxu0 %v219
    %296 = vmatprep.subr.mxu0 0.0
    %297 = vmatpush2.msra.mxu0 0.0
    %298 = vmatprep.subr.mxu0 0.0
    %299 = vmatpush2.msra.mxu0 0.0
    %300 = vmatprep.subr.mxu0 0.0
    %301 = vmatpush2.msra.mxu0 0.0
    %302 = vmatprep.subr.mxu0 0.0
    %303 = vmatpush2.msra.mxu0 0.0
    %304 = vmatprep.subr.mxu0 0.0
    %305 = vmatpush2.msra.mxu0 0.0
    %306 = vmatprep.subr.mxu0 0.0
    %307 = vmatpush2.msra.mxu0 0.0
    %308 = vmatprep.subr.mxu0 0.0
    %309 = vmatpush2.msra.mxu0 0.0
    %310 = vmatprep.subr.mxu0 0.0
    %311 = vmatpush2.msra.mxu0 0.0
    %312 = vmatprep.subr.mxu0 0.0
    %313 = vmatpush2.msra.mxu0 0.0
    %314 = vmatprep.subr.mxu0 0.0
    %315 = vmatpush2.msra.mxu0 0.0
    %316 = vmatprep.subr.mxu0 0.0
    %317 = vmatpush2.msra.mxu0 0.0
    %318 = vmatprep.subr.mxu0 0.0
    %319 = vmatpush2.msra.mxu0 0.0
    %320 = vmatprep.subr.mxu0 0.0
    %321 = vmatpush2.msra.mxu0 0.0
    %322 = vmatprep.subr.mxu0 0.0
    %323 = vmatpush2.msra.mxu0 0.0
    %324 = vmatprep.subr.mxu0 0.0
    %325 = vmatpush2.msra.mxu0 0.0
    %326 = vmatprep.subr.mxu0 0.0
    %327 = vmatpush2.msra.mxu0 0.0
    %328 = vmatprep.mubr.f32.mxu0 0.0
    %329 = vmatmul.mubr.f32.gmra.mxu0 %v253
    %v330 = vpop.f32.mrf.mxu0
    %v331 = vadd.f32 %v234, %v330
    %v332 = vpop.f32.mrf.mxu0
    %333 = vmatprep.mubr.f32.mxu0 0.0
    %334 = vmatmul.mubr.f32.gmra.mxu0 %v256
    %v335 = vpop.f32.mrf.mxu0
    %v336 = vadd.f32 %v239, %v335
    %v337 = vpop.f32.mrf.mxu0
    %338 = vmatprep.mubr.f32.mxu0 0.0
    %339 = vmatmul.mubr.f32.gmra.mxu0 %v259
    %v340 = vpop.f32.mrf.mxu0
    %v341 = vadd.f32 %v244, %v340
    %v342 = vpop.f32.mrf.mxu0
    %343 = vmatprep.mubr.f32.mxu0 0.0
    %344 = vmatmul.mubr.f32.gmra.mxu0 %v262
    %v345 = vpop.f32.mrf.mxu0
    %v346 = vadd.f32 %v249, %v345
    %v347 = vpop.f32.mrf.mxu0
    %348 = vdwg.mxu0
    %v349 = vmax.f32 %v331, 0.0
    %v350 = vmax.f32 %v336, 0.0
    %v351 = vmax.f32 %v341, 0.0
    %v352 = vmax.f32 %v346, 0.0
    %v353 = vld [vmem:[%s5] sm:$0xff]
    %v354 = vld [vmem:[%s5 + $0x8] sm:$0xff]
    %v355 = vld [vmem:[%s5 + $0x10] sm:$0xff]
    %v356 = vld [vmem:[%s5 + $0x18] sm:$0xff]
    %v357 = vld [vmem:[#allocation2] sm:$0x1]
    %359 = vset.pattern.permute.xlu0 0
    %360 = vperm.xlu0 %359, %v353
    %v361 = vpop.permute.xlu0 %360
    %364 = vset.pattern.permute.xlu0 0
    %365 = vperm.xlu0 %364, %v354
    %v366 = vpop.permute.xlu0 %365
    %369 = vset.pattern.permute.xlu0 0
    %370 = vperm.xlu0 %369, %v355
    %v371 = vpop.permute.xlu0 %370
    %374 = vset.pattern.permute.xlu0 0
    %375 = vperm.xlu0 %374, %v356
    %v376 = vpop.permute.xlu0 %375
    %v378 = vmul.f32 %v361, %v349
    %v379 = vmul.f32 %v366, %v350
    %v380 = vmul.f32 %v371, %v351
    %v381 = vmul.f32 %v376, %v352
    %v382 = vadd.f32 %v378, %v379
    %v383 = vadd.f32 %v382, %v380
    %v384 = vadd.f32 %v383, %v381
    %v385 = vrot.slane %v384, 4
    %v386 = vadd.f32 %v384, %v385
    %v387 = vrot.slane %v386, 2
    %v388 = vadd.f32 %v386, %v387
    %v389 = vrot.slane %v388, 1
    %v390 = vadd.f32 %v388, %v389
    %392 = vset.pattern.permute.xlu0 0
    %393 = vperm.xlu0 %392, %v357
    %v394 = vpop.permute.xlu0 %393
    %v396 = vlaneseq
    %v397 = vshrl.u32 %v396, 7
    %v398 = vsub.s32 0, %v397
    %v399 = vrot.slane %v394, %v398
    %v400 = vadd.f32 %v390, %v399
    %401 = vst [vmem:[#allocation3] sm:$0x1] %v400
    // Predicated region
    $region30: #{tpu_custom_call.1} parent=1 // pred_check
      _
    $region31: #{tpu_custom_call.1} parent=1 // pred_check_branch
      %403 = sbr.rel (0) target = $region33
    $region32: #{tpu_custom_call.1} parent=1 // pred_region
      %s405 = ssub.s32 16, 16
      %406 = vsyncadd [#allocation4], %s405
      %s408 = sshll.u32 [#allocation3], 4
      %s409 = int_to_ptr.vmem [resolvable:$true] %s408
      %411 = dma.vmem_to_hbm [thread:$0]  %s409, 16, %s7, [#allocation4]
    $region33: #{tpu_custom_call.1} parent=1 // pred_fallthru
      _
    // Predicated region
    $region34: #{tpu_custom_call.1} parent=1 // pred_check
      _
    $region35: #{tpu_custom_call.1} parent=1 // pred_check_branch
      %413 = sbr.rel (0) target = $region37
    $region36: #{tpu_custom_call.1} parent=1 // pred_region
      %414 = dma.done [#allocation4], 16
    $region37: #{tpu_custom_call.1} parent=1 // pred_fallthru
      _
    %415 = vsyncpa [#allocation4], 1

</llo_original>
